<compile_context>
chip_gen: v5e
topology: v5e:2x2
jax: 0.10.0
libtpu: 0.0.40
codegen_flags: <defaults>
</compile_context>

<pallas_src>
import jax
import jax.numpy as jnp
from jax.experimental import pallas as pl
from jax.experimental.pallas import tpu as pltpu

_LANE = 128  # TPU vreg lane width


def mlp_kernel(x_ref, w1_ref, b1_ref, w2_ref, b2_ref,
               w3_ref, b3_ref, w4_ref, b4_ref, o_ref):
    cd = w1_ref.dtype          # MXU operand dtype (bf16 by default)
    x = x_ref[...]

    # fc1 + sigmoid (tanh form: single EUP op per element, math done in f32)
    h1 = jnp.dot(x, w1_ref[...], preferred_element_type=jnp.float32) + b1_ref[...]
    h1 = (0.5 + 0.5 * jnp.tanh(0.5 * h1)).astype(cd)

    # fc2 + sigmoid
    h2 = jnp.dot(h1, w2_ref[...], preferred_element_type=jnp.float32) + b2_ref[...]
    h2 = (0.5 + 0.5 * jnp.tanh(0.5 * h2)).astype(cd)

    # fc3 (last dim lane-padded to 128; padded columns carry a -1e30 f32 bias)
    h3 = jnp.dot(h2, w3_ref[...], preferred_element_type=jnp.float32) + b3_ref[...]

    # softmax over the padded last dim; padded logits contribute exp(.) == 0
    m = jnp.max(h3, axis=-1, keepdims=True)
    e = jnp.exp(h3 - m)
    p = (e * pl.reciprocal(jnp.sum(e, axis=-1, keepdims=True), approx=True)).astype(cd)

    # output layer: only the real D_out columns are produced / stored
    o = jnp.dot(p, w4_ref[...], preferred_element_type=jnp.float32) + b4_ref[...]
    o_ref[...] = o.astype(o_ref.dtype)


def prepare_params(params, compute_dtype=jnp.bfloat16):
    """Pad/cast weights once, outside the per-call forward path.

    bf16 is safe for MXU operands on v5e/v6e/v7x; accumulation and all
    element-wise math stay in f32 (biases are kept f32, so the -1e30 padded
    logit bias is exact).
    """
    w1, b1, w2, b2, w3, b3, w4, b4 = params
    d3 = w3.shape[1]
    d3p = max(_LANE, d3)
    w3p = jnp.pad(w3, ((0, 0), (0, d3p - d3)))
    b3p = jnp.pad(b3, ((0, 0), (0, d3p - d3)), constant_values=-1e30)
    w4p = jnp.pad(w4, ((0, d3p - w4.shape[0]), (0, 0)))
    cd = compute_dtype
    return (w1.astype(cd), b1.astype(jnp.float32),
            w2.astype(cd), b2.astype(jnp.float32),
            w3p.astype(cd), b3p.astype(jnp.float32),
            w4p.astype(cd), b4.astype(jnp.float32))


def _pick_tile(batch):
    # Small batch: one grid step (no per-step overhead, no exposed-DMA 2-step
    # grid).  Large batch: 256-512 row tiles with >= 8 grid steps so each v7x
    # TensorCore gets >= 4 pipelined iterations; tile capped well below the
    # v5e scoped-VMEM limit.
    if batch <= 1024:
        return batch
    for t in (512, 256):
        if pl.cdiv(batch, t) >= 8:
            return t
    return 256  # 1024 < batch < 2048 -> 5..8 steps


@jax.jit
def mlp_forward(x, prepared_params):
    (w1, b1, w2, b2, w3, b3, w4, b4) = prepared_params
    B, D_in = x.shape
    D_out = w4.shape[1]
    cd = w1.dtype

    tile_b = _pick_tile(B)
    Bp = pl.cdiv(B, tile_b) * tile_b
    xc = x.astype(cd)
    if Bp != B:  # zero-pad awkward batch sizes instead of collapsing the grid
        xc = jnp.pad(xc, ((0, Bp - B), (0, 0)))

    # Whole-array VMEM residency for the tiny grid-invariant weights/biases.
    wspec = pl.BlockSpec(memory_space=pltpu.MemorySpace.VMEM)

    flops = 2 * Bp * (w1.shape[0] * w1.shape[1] + w2.shape[0] * w2.shape[1]
                      + w3.shape[0] * w3.shape[1] + w4.shape[0] * w4.shape[1])
    transcendentals = Bp * (w1.shape[1] + w2.shape[1] + w3.shape[1])
    weight_bytes = sum(int(a.size) * a.dtype.itemsize
                       for a in (w1, b1, w2, b2, w3, b3, w4, b4))
    bytes_accessed = (int(xc.size) * xc.dtype.itemsize
                      + Bp * D_out * 4 + weight_bytes)

    out = pl.pallas_call(
        mlp_kernel,
        out_shape=jax.ShapeDtypeStruct((Bp, D_out), jnp.float32),
        grid=(Bp // tile_b,),
        in_specs=[
            pl.BlockSpec((tile_b, D_in), lambda i: (i, 0)),
            wspec, wspec, wspec, wspec, wspec, wspec, wspec, wspec,
        ],
        out_specs=pl.BlockSpec((tile_b, D_out), lambda i: (i, 0)),
        compiler_params=pltpu.CompilerParams(
            dimension_semantics=("parallel",)),
        cost_estimate=pl.CostEstimate(flops=int(flops),
                                      transcendentals=int(transcendentals),
                                      bytes_accessed=int(bytes_accessed)),
    )(xc, w1, b1, w2, b2, w3, b3, w4, b4)

    return out if Bp == B else out[:B]


def init_params(key, input_shape, output_shape):
    # torch.nn.Linear default init: U(-1/sqrt(fan_in), 1/sqrt(fan_in)) for W, b.
    dims = [(input_shape, 256), (256, 128), (128, 64), (64, output_shape)]
    params = []
    for din, dout in dims:
        kw, kb, key = jax.random.split(key, 3)
        scale = 1.0 / jnp.sqrt(jnp.float32(din))
        w = jax.random.uniform(kw, (din, dout), jnp.float32, -scale, scale)
        b = jax.random.uniform(kb, (1, dout), jnp.float32, -scale, scale)
        params += [w, b]
    return tuple(params)


def reference_forward(x, params):
    (w1, b1, w2, b2, w3, b3, w4, b4) = params
    h1 = jax.nn.sigmoid(x @ w1 + b1)
    h2 = jax.nn.sigmoid(h1 @ w2 + b2)
    h3 = h2 @ w3 + b3
    p = jax.nn.softmax(h3, axis=-1)
    return p @ w4 + b4


if __name__ == "__main__":
    key = jax.random.PRNGKey(0)
    kx, kp = jax.random.split(key)

    batch, input_shape, output_shape = 16, 32, 8
    x = jax.random.normal(kx, (batch, input_shape), jnp.float32)
    params = init_params(kp, input_shape, output_shape)

    prepared = prepare_params(params)  # pad/cast once, outside the forward path
    out = jax.block_until_ready(mlp_forward(x, prepared))

    ref = reference_forward(x, params)
    assert out.shape == (batch, output_shape)
    # bf16 MXU operands + approx EUP reciprocal in the softmax denominator
    # -> slightly looser tolerance (element math itself stays f32).
    assert jnp.allclose(out, ref, atol=2e-2, rtol=2e-2), "mismatch vs reference"

    print("KERNEL_OK")
</pallas_src>

<mosaic_0001>
module attributes {stable_mosaic.version = 11 : i64} {
  func.func @mlp_kernel(%arg0: i32, %arg1: memref<16x32xbf16, #tpu.memory_space<vmem>>, %arg2: memref<32x256xbf16, #tpu.memory_space<vmem>>, %arg3: memref<1x256xf32, #tpu.memory_space<vmem>>, %arg4: memref<256x128xbf16, #tpu.memory_space<vmem>>, %arg5: memref<1x128xf32, #tpu.memory_space<vmem>>, %arg6: memref<128x128xbf16, #tpu.memory_space<vmem>>, %arg7: memref<1x128xf32, #tpu.memory_space<vmem>>, %arg8: memref<128x8xbf16, #tpu.memory_space<vmem>>, %arg9: memref<1x8xf32, #tpu.memory_space<vmem>>, %arg10: memref<16x8xf32, #tpu.memory_space<vmem>>) attributes {dimension_semantics = [#tpu.dimension_semantics<parallel>], iteration_bounds = array<i64: 1>, scalar_prefetch = 0 : i64, scratch_operands = 0 : i64, tpu.core_type = #tpu.core_type<tc>, window_params = [{transform_indices = @transform_0, window_bounds = array<i64: 16, 32>}, {pipeline_mode = #tpu.pipeline_mode<synchronous>, transform_indices = @transform_1, window_bounds = array<i64: 32, 256>}, {pipeline_mode = #tpu.pipeline_mode<synchronous>, transform_indices = @transform_2, window_bounds = array<i64: 1, 256>}, {pipeline_mode = #tpu.pipeline_mode<synchronous>, transform_indices = @transform_3, window_bounds = array<i64: 256, 128>}, {pipeline_mode = #tpu.pipeline_mode<synchronous>, transform_indices = @transform_4, window_bounds = array<i64: 1, 128>}, {pipeline_mode = #tpu.pipeline_mode<synchronous>, transform_indices = @transform_5, window_bounds = array<i64: 128, 128>}, {pipeline_mode = #tpu.pipeline_mode<synchronous>, transform_indices = @transform_6, window_bounds = array<i64: 1, 128>}, {pipeline_mode = #tpu.pipeline_mode<synchronous>, transform_indices = @transform_7, window_bounds = array<i64: 128, 8>}, {pipeline_mode = #tpu.pipeline_mode<synchronous>, transform_indices = @transform_8, window_bounds = array<i64: 1, 8>}, {transform_indices = @transform_9, window_bounds = array<i64: 16, 8>}]} {
    %c0 = arith.constant 0 : index
    %c0_0 = arith.constant 0 : index
    %0 = vector.load %arg1[%c0, %c0_0] : memref<16x32xbf16, #tpu.memory_space<vmem>>, vector<16x32xbf16>
    %c0_1 = arith.constant 0 : index
    %c0_2 = arith.constant 0 : index
    %1 = vector.load %arg2[%c0_1, %c0_2] : memref<32x256xbf16, #tpu.memory_space<vmem>>, vector<32x256xbf16>
    %cst = arith.constant dense<0.000000e+00> : vector<16x256xf32>
    %2 = tpu.matmul %0, %1, %cst {dimension_numbers = #tpu.dot_dimension_numbers<[1], [0], [0], [1], [0, 0, 1, 1], [], []>} : vector<16x32xbf16>, vector<32x256xbf16>, vector<16x256xf32> -> vector<16x256xf32>
    %c0_3 = arith.constant 0 : index
    %c0_4 = arith.constant 0 : index
    %3 = vector.load %arg3[%c0_3, %c0_4] : memref<1x256xf32, #tpu.memory_space<vmem>>, vector<1x256xf32>
    %4 = vector.broadcast %3 : vector<1x256xf32> to vector<16x256xf32>
    %5 = arith.addf %2, %4 : vector<16x256xf32>
    %cst_5 = arith.constant 5.000000e-01 : f32
    %6 = vector.broadcast %cst_5 : f32 to vector<16x256xf32>
    %7 = arith.mulf %6, %5 : vector<16x256xf32>
    %8 = math.tanh %7 : vector<16x256xf32>
    %cst_6 = arith.constant 5.000000e-01 : f32
    %9 = vector.broadcast %cst_6 : f32 to vector<16x256xf32>
    %10 = arith.mulf %9, %8 : vector<16x256xf32>
    %cst_7 = arith.constant 5.000000e-01 : f32
    %11 = vector.broadcast %cst_7 : f32 to vector<16x256xf32>
    %12 = arith.addf %11, %10 : vector<16x256xf32>
    %13 = arith.truncf %12 : vector<16x256xf32> to vector<16x256xbf16>
    %c0_8 = arith.constant 0 : index
    %c0_9 = arith.constant 0 : index
    %14 = vector.load %arg4[%c0_8, %c0_9] : memref<256x128xbf16, #tpu.memory_space<vmem>>, vector<256x128xbf16>
    %cst_10 = arith.constant dense<0.000000e+00> : vector<16x128xf32>
    %15 = tpu.matmul %13, %14, %cst_10 {dimension_numbers = #tpu.dot_dimension_numbers<[1], [0], [0], [1], [0, 0, 1, 1], [], []>} : vector<16x256xbf16>, vector<256x128xbf16>, vector<16x128xf32> -> vector<16x128xf32>
    %c0_11 = arith.constant 0 : index
    %c0_12 = arith.constant 0 : index
    %16 = vector.load %arg5[%c0_11, %c0_12] : memref<1x128xf32, #tpu.memory_space<vmem>>, vector<1x128xf32>
    %17 = vector.broadcast %16 : vector<1x128xf32> to vector<16x128xf32>
    %18 = arith.addf %15, %17 : vector<16x128xf32>
    %cst_13 = arith.constant 5.000000e-01 : f32
    %19 = vector.broadcast %cst_13 : f32 to vector<16x128xf32>
    %20 = arith.mulf %19, %18 : vector<16x128xf32>
    %21 = math.tanh %20 : vector<16x128xf32>
    %cst_14 = arith.constant 5.000000e-01 : f32
    %22 = vector.broadcast %cst_14 : f32 to vector<16x128xf32>
    %23 = arith.mulf %22, %21 : vector<16x128xf32>
    %cst_15 = arith.constant 5.000000e-01 : f32
    %24 = vector.broadcast %cst_15 : f32 to vector<16x128xf32>
    %25 = arith.addf %24, %23 : vector<16x128xf32>
    %26 = arith.truncf %25 : vector<16x128xf32> to vector<16x128xbf16>
    %c0_16 = arith.constant 0 : index
    %c0_17 = arith.constant 0 : index
    %27 = vector.load %arg6[%c0_16, %c0_17] : memref<128x128xbf16, #tpu.memory_space<vmem>>, vector<128x128xbf16>
    %cst_18 = arith.constant dense<0.000000e+00> : vector<16x128xf32>
    %28 = tpu.matmul %26, %27, %cst_18 {dimension_numbers = #tpu.dot_dimension_numbers<[1], [0], [0], [1], [0, 0, 1, 1], [], []>} : vector<16x128xbf16>, vector<128x128xbf16>, vector<16x128xf32> -> vector<16x128xf32>
    %c0_19 = arith.constant 0 : index
    %c0_20 = arith.constant 0 : index
    %29 = vector.load %arg7[%c0_19, %c0_20] : memref<1x128xf32, #tpu.memory_space<vmem>>, vector<1x128xf32>
    %30 = vector.broadcast %29 : vector<1x128xf32> to vector<16x128xf32>
    %31 = arith.addf %28, %30 : vector<16x128xf32>
    %cst_21 = arith.constant dense<0xFF800000> : vector<16xf32>
    %32 = vector.multi_reduction <maximumf>, %31, %cst_21 [1] : vector<16x128xf32> to vector<16xf32>
    %33 = vector.shape_cast %32 : vector<16xf32> to vector<16x1xf32>
    %34 = vector.broadcast %33 : vector<16x1xf32> to vector<16x128xf32>
    %35 = arith.subf %31, %34 : vector<16x128xf32>
    %36 = math.exp %35 : vector<16x128xf32>
    %cst_22 = arith.constant dense<0.000000e+00> : vector<16xf32>
    %37 = vector.multi_reduction <add>, %36, %cst_22 [1] : vector<16x128xf32> to vector<16xf32>
    %38 = vector.shape_cast %37 : vector<16xf32> to vector<16x1xf32>
    %39 = tpu.reciprocal %38 {approx = true} : vector<16x1xf32> -> vector<16x1xf32>
    %40 = vector.broadcast %39 : vector<16x1xf32> to vector<16x128xf32>
    %41 = arith.mulf %36, %40 : vector<16x128xf32>
    %42 = arith.truncf %41 : vector<16x128xf32> to vector<16x128xbf16>
    %c0_23 = arith.constant 0 : index
    %c0_24 = arith.constant 0 : index
    %43 = vector.load %arg8[%c0_23, %c0_24] : memref<128x8xbf16, #tpu.memory_space<vmem>>, vector<128x8xbf16>
    %cst_25 = arith.constant dense<0.000000e+00> : vector<16x8xf32>
    %44 = tpu.matmul %42, %43, %cst_25 {dimension_numbers = #tpu.dot_dimension_numbers<[1], [0], [0], [1], [0, 0, 1, 1], [], []>} : vector<16x128xbf16>, vector<128x8xbf16>, vector<16x8xf32> -> vector<16x8xf32>
    %c0_26 = arith.constant 0 : index
    %c0_27 = arith.constant 0 : index
    %45 = vector.load %arg9[%c0_26, %c0_27] : memref<1x8xf32, #tpu.memory_space<vmem>>, vector<1x8xf32>
    %46 = vector.broadcast %45 : vector<1x8xf32> to vector<16x8xf32>
    %47 = arith.addf %44, %46 : vector<16x8xf32>
    %c0_28 = arith.constant 0 : index
    %c0_29 = arith.constant 0 : index
    %48 = vector.load %arg10[%c0_28, %c0_29] : memref<16x8xf32, #tpu.memory_space<vmem>>, vector<16x8xf32>
    tpu.vector_store %arg10[%c0_28, %c0_29], %47 {strides = array<i32>} : memref<16x8xf32, #tpu.memory_space<vmem>>, vector<16x8xf32>,
    return
  }
  func.func @transform_0(%arg0: i32) -> (i32, i32) {
    %c0_i32 = arith.constant 0 : i32
    %c0_i32_0 = arith.constant 0 : i32
    return %arg0, %c0_i32 : i32, i32
  }
  func.func @transform_1(%arg0: i32) -> (i32, i32) {
    %c0_i32 = arith.constant 0 : i32
    %c0_i32_0 = arith.constant 0 : i32
    %c0_i32_1 = arith.constant 0 : i32
    return %c0_i32, %c0_i32_0 : i32, i32
  }
  func.func @transform_2(%arg0: i32) -> (i32, i32) {
    %c0_i32 = arith.constant 0 : i32
    %c0_i32_0 = arith.constant 0 : i32
    %c0_i32_1 = arith.constant 0 : i32
    return %c0_i32, %c0_i32_0 : i32, i32
  }
  func.func @transform_3(%arg0: i32) -> (i32, i32) {
    %c0_i32 = arith.constant 0 : i32
    %c0_i32_0 = arith.constant 0 : i32
    %c0_i32_1 = arith.constant 0 : i32
    return %c0_i32, %c0_i32_0 : i32, i32
  }
  func.func @transform_4(%arg0: i32) -> (i32, i32) {
    %c0_i32 = arith.constant 0 : i32
    %c0_i32_0 = arith.constant 0 : i32
    %c0_i32_1 = arith.constant 0 : i32
    return %c0_i32, %c0_i32_0 : i32, i32
  }
  func.func @transform_5(%arg0: i32) -> (i32, i32) {
    %c0_i32 = arith.constant 0 : i32
    %c0_i32_0 = arith.constant 0 : i32
    %c0_i32_1 = arith.constant 0 : i32
    return %c0_i32, %c0_i32_0 : i32, i32
  }
  func.func @transform_6(%arg0: i32) -> (i32, i32) {
    %c0_i32 = arith.constant 0 : i32
    %c0_i32_0 = arith.constant 0 : i32
    %c0_i32_1 = arith.constant 0 : i32
    return %c0_i32, %c0_i32_0 : i32, i32
  }
  func.func @transform_7(%arg0: i32) -> (i32, i32) {
    %c0_i32 = arith.constant 0 : i32
    %c0_i32_0 = arith.constant 0 : i32
    %c0_i32_1 = arith.constant 0 : i32
    return %c0_i32, %c0_i32_0 : i32, i32
  }
  func.func @transform_8(%arg0: i32) -> (i32, i32) {
    %c0_i32 = arith.constant 0 : i32
    %c0_i32_0 = arith.constant 0 : i32
    %c0_i32_1 = arith.constant 0 : i32
    return %c0_i32, %c0_i32_0 : i32, i32
  }
  func.func @transform_9(%arg0: i32) -> (i32, i32) {
    %c0_i32 = arith.constant 0 : i32
    %c0_i32_0 = arith.constant 0 : i32
    return %arg0, %c0_i32 : i32, i32
  }
}

</mosaic_0001>

<llo_original>
// kernel: mlp_forward.1
$region0: #{mlp_forward.1}
  #allocation0 [shape = 'u32[]', space=smem, size = 0x4, offset = 0x4, fixed_abs, tag = 'smem constant byte address 0x4 - core index']
  #allocation1 [shape = 'u32[72,128]{1,0:T(1,128)}', space=vmem, size = 0x9000, scoped, tag = 'internal scratch']
  %s0 = inlined_call_operand.vmem [shape: bf16[16,32], index: 0, kind: input, shape index: {}]
  %s1 = inlined_call_operand.vmem [shape: bf16[32,256], index: 1, kind: input, shape index: {}]
  %s2 = inlined_call_operand.hbm [shape: f32[1,256], index: 2, kind: input, shape index: {}]
  %s3 = inlined_call_operand.hbm [shape: bf16[256,128], index: 3, kind: input, shape index: {}]
  %s4 = inlined_call_operand.hbm [shape: f32[1,128], index: 4, kind: input, shape index: {}]
  %s5 = inlined_call_operand.vmem [shape: bf16[128,128], index: 5, kind: input, shape index: {}]
  %s6 = inlined_call_operand.vmem [shape: f32[1,128], index: 6, kind: input, shape index: {}]
  %s7 = inlined_call_operand.vmem [shape: bf16[128,8], index: 7, kind: input, shape index: {}]
  %s8 = inlined_call_operand.vmem [shape: f32[1,8], index: 8, kind: input, shape index: {}]
  %s9 = inlined_call_operand.vmem [shape: f32[16,8], index: 9, kind: output, shape index: {}]
  %s10 = sld [smem:[#allocation0]]
  $region58: #{mlp_forward.1} parent=0
    _
  %s12 = ssub.s32 1, %s10
  %s13 = scalar_select 0, %s12, %s10
  $region1: #{mlp_forward.1} parent=0
    #allocation2 [shape = 'u8[1024]{0}', space=vmem, size = 0x400, scoped, tag = 'input window, operand 2, single buffered']
    #allocation3 [shape = 's32[1]{0}', space=sflag, size = 0x4, scoped, tag = 'scoped memory for mlp_forward.1']
    #allocation4 [shape = 'u8[65536]{0}', space=vmem, size = 0x10000, scoped, tag = 'input window, operand 3, single buffered']
    #allocation5 [shape = 's32[1]{0}', space=sflag, size = 0x4, scoped, tag = 'scoped memory for mlp_forward.1']
    #allocation6 [shape = 'u8[512]{0}', space=vmem, size = 0x400, scoped, tag = 'input window, operand 4, single buffered']
    %14 = vsyncpa [#allocation3], 0
    %15 = vsyncpa [#allocation5], 0
    // Predicated region
    $region2: #{mlp_forward.1} parent=1 // pred_check
      _
    $region3: #{mlp_forward.1} parent=1 // pred_check_branch
      %17 = sbr.rel (0) target = $region5
    $region4: #{mlp_forward.1} parent=1 // pred_region
      _
    $region5: #{mlp_forward.1} parent=1 // pred_fallthru
      _
    // Predicated region
    $region6: #{mlp_forward.1} parent=1 // pred_check
      _
    $region7: #{mlp_forward.1} parent=1 // pred_check_branch
      %19 = sbr.rel (0) target = $region9
    $region8: #{mlp_forward.1} parent=1 // pred_region
      _
    $region9: #{mlp_forward.1} parent=1 // pred_fallthru
      _
    // Predicated region
    $region10: #{mlp_forward.1} parent=1 // pred_check
      _
    $region11: #{mlp_forward.1} parent=1 // pred_check_branch
      %21 = sbr.rel (0) target = $region13
    $region12: #{mlp_forward.1} parent=1 // pred_region
      %23 = vsyncadd [#allocation3], 0
      %s25 = sshll.u32 %s2, 4
      %s26 = int_to_ptr.hbm [resolvable:$true] %s25
      %s27 = sshll.u32 [#allocation2], 4
      %s28 = int_to_ptr.vmem [resolvable:$true] %s27
      %30 = dma.hbm_to_vmem [thread:$0]  %s26, 32, %s28, [#allocation3]
    $region13: #{mlp_forward.1} parent=1 // pred_fallthru
      _
    // Predicated region
    $region14: #{mlp_forward.1} parent=1 // pred_check
      _
    $region15: #{mlp_forward.1} parent=1 // pred_check_branch
      %32 = sbr.rel (0) target = $region17
    $region16: #{mlp_forward.1} parent=1 // pred_region
      %34 = vsyncadd [#allocation5], 0
      %s35 = sshll.u32 %s3, 4
      %s36 = int_to_ptr.hbm [resolvable:$true] %s35
      %s37 = sshll.u32 [#allocation4], 4
      %s38 = int_to_ptr.vmem [resolvable:$true] %s37
      %43 = dma.hbm_to_vmem [thread:$0]  %s36, 2048, %s38, [#allocation5], 64, 64, 4
    $region17: #{mlp_forward.1} parent=1 // pred_fallthru
      _
    // Predicated region
    $region18: #{mlp_forward.1} parent=1 // pred_check
      _
    $region19: #{mlp_forward.1} parent=1 // pred_check_branch
      %45 = sbr.rel (0) target = $region21
    $region20: #{mlp_forward.1} parent=1 // pred_region
      %47 = vsyncadd [#allocation5], 0
      %s49 = sshll.u32 %s4, 4
      %s50 = int_to_ptr.hbm [resolvable:$true] %s49
      %s51 = sshll.u32 [#allocation6], 4
      %s52 = int_to_ptr.vmem [resolvable:$true] %s51
      %54 = dma.hbm_to_vmem [thread:$0]  %s50, 16, %s52, [#allocation5]
    $region21: #{mlp_forward.1} parent=1 // pred_fallthru
      _
    // Predicated region
    $region22: #{mlp_forward.1} parent=1 // pred_check
      _
    $region23: #{mlp_forward.1} parent=1 // pred_check_branch
      %56 = sbr.rel (0) target = $region25
    $region24: #{mlp_forward.1} parent=1 // pred_region
      _
    $region25: #{mlp_forward.1} parent=1 // pred_fallthru
      _
    // Predicated region
    $region26: #{mlp_forward.1} parent=1 // pred_check
      _
    $region27: #{mlp_forward.1} parent=1 // pred_check_branch
      %58 = sbr.rel (0) target = $region29
    $region28: #{mlp_forward.1} parent=1 // pred_region
      _
    $region29: #{mlp_forward.1} parent=1 // pred_fallthru
      _
    // Predicated region
    $region30: #{mlp_forward.1} parent=1 // pred_check
      _
    $region31: #{mlp_forward.1} parent=1 // pred_check_branch
      %60 = sbr.rel (0) target = $region33
    $region32: #{mlp_forward.1} parent=1 // pred_region
      _
    $region33: #{mlp_forward.1} parent=1 // pred_fallthru
      _
    // Predicated region
    $region34: #{mlp_forward.1} parent=1 // pred_check
      _
    $region35: #{mlp_forward.1} parent=1 // pred_check_branch
      %62 = sbr.rel (0) target = $region37
    $region36: #{mlp_forward.1} parent=1 // pred_region
      _
    $region37: #{mlp_forward.1} parent=1 // pred_fallthru
      _
    // Predicated region
    $region38: #{mlp_forward.1} parent=1 // pred_check
      _
    $region39: #{mlp_forward.1} parent=1 // pred_check_branch
      %64 = sbr.rel (0) target = $region41
    $region40: #{mlp_forward.1} parent=1 // pred_region
      %66 = dma.done [#allocation3], 32
    $region41: #{mlp_forward.1} parent=1 // pred_fallthru
      _
    // Predicated region
    $region42: #{mlp_forward.1} parent=1 // pred_check
      _
    $region43: #{mlp_forward.1} parent=1 // pred_check_branch
      %68 = sbr.rel (0) target = $region45
    $region44: #{mlp_forward.1} parent=1 // pred_region
      %70 = dma.done [#allocation5], 2048
    $region45: #{mlp_forward.1} parent=1 // pred_fallthru
      _
    // Predicated region
    $region46: #{mlp_forward.1} parent=1 // pred_check
      _
    $region47: #{mlp_forward.1} parent=1 // pred_check_branch
      %72 = sbr.rel (0) target = $region49
    $region48: #{mlp_forward.1} parent=1 // pred_region
      %74 = dma.done [#allocation5], 16
    $region49: #{mlp_forward.1} parent=1 // pred_fallthru
      _
    %v76 = vld [vmem:[%s0] sm:$0xf]
    %v77 = vld [vmem:[%s0 + $0x4] sm:$0xf]
    %v78 = vld [vmem:[%s1] sm:$0xff]
    %v79 = vld [vmem:[%s1 + $0x8] sm:$0xff]
    %v80 = vld [vmem:[%s1 + $0x10] sm:$0xff]
    %v81 = vld [vmem:[%s1 + $0x18] sm:$0xff]
    %v82 = vld [vmem:[#allocation2] sm:$0x3]
    %v84 = vperm.slane %v82, 0
    %v85 = vperm.slane %v82, 1
    %v90 = vunpack.c.l.b16 %v76
    %v91 = vunpack.c.l.b16 %v77
    %v92 = vpack.c.b16 %v91, %v90
    %v97 = vunpack.c.l.b16 %v78
    %v98 = vunpack.c.h.b16 %v78
    %v99 = vunpack.c.l.b16 %v79
    %v100 = vunpack.c.h.b16 %v79
    %v101 = vunpack.c.l.b16 %v80
    %v102 = vunpack.c.h.b16 %v80
    %v103 = vunpack.c.l.b16 %v81
    %v104 = vunpack.c.h.b16 %v81
    %v105 = vpack.c.b16 %v99, %v97
    %v106 = vpack.c.b16 %v100, %v98
    %v107 = vpack.c.b16 %v103, %v101
    %v108 = vpack.c.b16 %v104, %v102
    %vm113 = vcmask 261120
    %v115 = vsel %vm113, %v92, 0
    %117 = vmatpush.bf16.msra.mxu0 0
    %118 = vmatpush.bf16.msra.mxu0 0
    %119 = vmatpush.bf16.msra.mxu0 0
    %120 = vmatpush.bf16.msra.mxu0 0
    %121 = vmatpush.bf16.msra.mxu0 0
    %122 = vmatpush.bf16.msra.mxu0 0
    %123 = vmatpush.bf16.msra.mxu0 %v107
    %124 = vmatpush.bf16.msra.mxu0 %v105
    %125 = vmatmul.bf16.gmra.mxu0 %v115
    %v126 = vpop.f32.mrf.mxu0
    %v127 = vadd.f32 %v84, %v126
    %v128 = vpop.f32.mrf.mxu0
    %v129 = vadd.f32 %v84, %v128
    %130 = vdwg.mxu0
    %131 = vmatpush.bf16.msra.mxu0 0
    %132 = vmatpush.bf16.msra.mxu0 0
    %133 = vmatpush.bf16.msra.mxu0 0
    %134 = vmatpush.bf16.msra.mxu0 0
    %135 = vmatpush.bf16.msra.mxu0 0
    %136 = vmatpush.bf16.msra.mxu0 0
    %137 = vmatpush.bf16.msra.mxu0 %v108
    %138 = vmatpush.bf16.msra.mxu0 %v106
    %139 = vmatmul.bf16.gmra.mxu0 %v115
    %v140 = vpop.f32.mrf.mxu0
    %v141 = vadd.f32 %v85, %v140
    %v142 = vpop.f32.mrf.mxu0
    %v143 = vadd.f32 %v85, %v142
    %144 = vdwg.mxu0
    %v145 = vmul.f32 %v127, 0.5
    %v146 = vmul.f32 %v141, 0.5
    %v147 = vmul.f32 %v129, 0.5
    %v148 = vmul.f32 %v143, 0.5
    %v149 = vtanh.pop %v145
    %v150 = vtanh.pop %v146
    %v151 = vtanh.pop %v147
    %v152 = vtanh.pop %v148
    %v153 = vmul.f32 %v149, 0.5
    %v154 = vmul.f32 %v150, 0.5
    %v155 = vmul.f32 %v151, 0.5
    %v156 = vmul.f32 %v152, 0.5
    %v157 = vadd.f32 %v153, 0.5
    %v158 = vadd.f32 %v154, 0.5
    %v159 = vadd.f32 %v155, 0.5
    %v160 = vadd.f32 %v156, 0.5
    %v161 = vpack.c.bf16 %v159, %v157
    %v162 = vpack.c.bf16 %v160, %v158
    %v163 = vld [vmem:[#allocation4] sm:$0xf]
    %v164 = vld [vmem:[#allocation4 + $0x4] sm:$0xf]
    %v165 = vld [vmem:[#allocation4 + $0x8] sm:$0xf]
    %v166 = vld [vmem:[#allocation4 + $0xc] sm:$0xf]
    %v167 = vld [vmem:[#allocation4 + $0x10] sm:$0xf]
    %v168 = vld [vmem:[#allocation4 + $0x14] sm:$0xf]
    %v169 = vld [vmem:[#allocation4 + $0x18] sm:$0xf]
    %v170 = vld [vmem:[#allocation4 + $0x1c] sm:$0xf]
    %v171 = vld [vmem:[#allocation4 + $0x20] sm:$0xf]
    %v172 = vld [vmem:[#allocation4 + $0x24] sm:$0xf]
    %v173 = vld [vmem:[#allocation4 + $0x28] sm:$0xf]
    %v174 = vld [vmem:[#allocation4 + $0x2c] sm:$0xf]
    %v175 = vld [vmem:[#allocation4 + $0x30] sm:$0xf]
    %v176 = vld [vmem:[#allocation4 + $0x34] sm:$0xf]
    %v177 = vld [vmem:[#allocation4 + $0x38] sm:$0xf]
    %v178 = vld [vmem:[#allocation4 + $0x3c] sm:$0xf]
    %v179 = vld [vmem:[#allocation4 + $0x40] sm:$0xf]
    %v180 = vld [vmem:[#allocation4 + $0x44] sm:$0xf]
    %v181 = vld [vmem:[#allocation4 + $0x48] sm:$0xf]
    %v182 = vld [vmem:[#allocation4 + $0x4c] sm:$0xf]
    %v183 = vld [vmem:[#allocation4 + $0x50] sm:$0xf]
    %v184 = vld [vmem:[#allocation4 + $0x54] sm:$0xf]
    %v185 = vld [vmem:[#allocation4 + $0x58] sm:$0xf]
    %v186 = vld [vmem:[#allocation4 + $0x5c] sm:$0xf]
    %v187 = vld [vmem:[#allocation4 + $0x60] sm:$0xf]
    %v188 = vld [vmem:[#allocation4 + $0x64] sm:$0xf]
    %v189 = vld [vmem:[#allocation4 + $0x68] sm:$0xf]
    %v190 = vld [vmem:[#allocation4 + $0x6c] sm:$0xf]
    %v191 = vld [vmem:[#allocation4 + $0x70] sm:$0xf]
    %v192 = vld [vmem:[#allocation4 + $0x74] sm:$0xf]
    %v193 = vld [vmem:[#allocation4 + $0x78] sm:$0xf]
    %v194 = vld [vmem:[#allocation4 + $0x7c] sm:$0xf]
    %v195 = vld [vmem:[#allocation6] sm:$0x1]
    %v197 = vperm.slane %v195, 0
    %v231 = vunpack.c.l.b16 %v163
    %v232 = vunpack.c.l.b16 %v164
    %v233 = vunpack.c.l.b16 %v165
    %v234 = vunpack.c.l.b16 %v166
    %v235 = vunpack.c.l.b16 %v167
    %v236 = vunpack.c.l.b16 %v168
    %v237 = vunpack.c.l.b16 %v169
    %v238 = vunpack.c.l.b16 %v170
    %v239 = vunpack.c.l.b16 %v171
    %v240 = vunpack.c.l.b16 %v172
    %v241 = vunpack.c.l.b16 %v173
    %v242 = vunpack.c.l.b16 %v174
    %v243 = vunpack.c.l.b16 %v175
    %v244 = vunpack.c.l.b16 %v176
    %v245 = vunpack.c.l.b16 %v177
    %v246 = vunpack.c.l.b16 %v178
    %v247 = vunpack.c.l.b16 %v179
    %v248 = vunpack.c.l.b16 %v180
    %v249 = vunpack.c.l.b16 %v181
    %v250 = vunpack.c.l.b16 %v182
    %v251 = vunpack.c.l.b16 %v183
    %v252 = vunpack.c.l.b16 %v184
    %v253 = vunpack.c.l.b16 %v185
    %v254 = vunpack.c.l.b16 %v186
    %v255 = vunpack.c.l.b16 %v187
    %v256 = vunpack.c.l.b16 %v188
    %v257 = vunpack.c.l.b16 %v189
    %v258 = vunpack.c.l.b16 %v190
    %v259 = vunpack.c.l.b16 %v191
    %v260 = vunpack.c.l.b16 %v192
    %v261 = vunpack.c.l.b16 %v193
    %v262 = vunpack.c.l.b16 %v194
    %v263 = vpack.c.b16 %v232, %v231
    %v264 = vpack.c.b16 %v234, %v233
    %v265 = vpack.c.b16 %v236, %v235
    %v266 = vpack.c.b16 %v238, %v237
    %v267 = vpack.c.b16 %v240, %v239
    %v268 = vpack.c.b16 %v242, %v241
    %v269 = vpack.c.b16 %v244, %v243
    %v270 = vpack.c.b16 %v246, %v245
    %v271 = vpack.c.b16 %v248, %v247
    %v272 = vpack.c.b16 %v250, %v249
    %v273 = vpack.c.b16 %v252, %v251
    %v274 = vpack.c.b16 %v254, %v253
    %v275 = vpack.c.b16 %v256, %v255
    %v276 = vpack.c.b16 %v258, %v257
    %v277 = vpack.c.b16 %v260, %v259
    %v278 = vpack.c.b16 %v262, %v261
    %295 = vmatpush.bf16.msra.mxu0 %v270
    %296 = vmatpush.bf16.msra.mxu0 %v269
    %297 = vmatpush.bf16.msra.mxu0 %v268
    %298 = vmatpush.bf16.msra.mxu0 %v267
    %299 = vmatpush.bf16.msra.mxu0 %v266
    %300 = vmatpush.bf16.msra.mxu0 %v265
    %301 = vmatpush.bf16.msra.mxu0 %v264
    %302 = vmatpush.bf16.msra.mxu0 %v263
    %303 = vmatmul.bf16.gmra.mxu0 %v161
    %v304 = vpop.f32.mrf.mxu0
    %v305 = vadd.f32 %v197, %v304
    %v306 = vpop.f32.mrf.mxu0
    %v307 = vadd.f32 %v197, %v306
    %308 = vdwg.mxu0
    %309 = vmatpush.bf16.msra.mxu0 %v278
    %310 = vmatpush.bf16.msra.mxu0 %v277
    %311 = vmatpush.bf16.msra.mxu0 %v276
    %312 = vmatpush.bf16.msra.mxu0 %v275
    %313 = vmatpush.bf16.msra.mxu0 %v274
    %314 = vmatpush.bf16.msra.mxu0 %v273
    %315 = vmatpush.bf16.msra.mxu0 %v272
    %316 = vmatpush.bf16.msra.mxu0 %v271
    %317 = vmatmul.bf16.gmra.mxu0 %v162
    %v318 = vpop.f32.mrf.mxu0
    %v319 = vadd.f32 %v305, %v318
    %v320 = vpop.f32.mrf.mxu0
    %v321 = vadd.f32 %v307, %v320
    %322 = vdwg.mxu0
    %v323 = vmul.f32 %v319, 0.5
    %v324 = vmul.f32 %v321, 0.5
    %v325 = vtanh.pop %v323
    %v326 = vtanh.pop %v324
    %v327 = vmul.f32 %v325, 0.5
    %v328 = vmul.f32 %v326, 0.5
    %v329 = vadd.f32 %v327, 0.5
    %v330 = vadd.f32 %v328, 0.5
    %v331 = vpack.c.bf16 %v330, %v329
    %v332 = vld [vmem:[%s5] sm:$0xf]
    %v333 = vld [vmem:[%s5 + $0x4] sm:$0xf]
    %v334 = vld [vmem:[%s5 + $0x8] sm:$0xf]
    %v335 = vld [vmem:[%s5 + $0xc] sm:$0xf]
    %v336 = vld [vmem:[%s5 + $0x10] sm:$0xf]
    %v337 = vld [vmem:[%s5 + $0x14] sm:$0xf]
    %v338 = vld [vmem:[%s5 + $0x18] sm:$0xf]
    %v339 = vld [vmem:[%s5 + $0x1c] sm:$0xf]
    %v340 = vld [vmem:[%s5 + $0x20] sm:$0xf]
    %v341 = vld [vmem:[%s5 + $0x24] sm:$0xf]
    %v342 = vld [vmem:[%s5 + $0x28] sm:$0xf]
    %v343 = vld [vmem:[%s5 + $0x2c] sm:$0xf]
    %v344 = vld [vmem:[%s5 + $0x30] sm:$0xf]
    %v345 = vld [vmem:[%s5 + $0x34] sm:$0xf]
    %v346 = vld [vmem:[%s5 + $0x38] sm:$0xf]
    %v347 = vld [vmem:[%s5 + $0x3c] sm:$0xf]
    %v348 = vld [vmem:[%s6] sm:$0x1]
    %v350 = vperm.slane %v348, 0
    %v368 = vunpack.c.l.b16 %v332
    %v369 = vunpack.c.l.b16 %v333
    %v370 = vunpack.c.l.b16 %v334
    %v371 = vunpack.c.l.b16 %v335
    %v372 = vunpack.c.l.b16 %v336
    %v373 = vunpack.c.l.b16 %v337
    %v374 = vunpack.c.l.b16 %v338
    %v375 = vunpack.c.l.b16 %v339
    %v376 = vunpack.c.l.b16 %v340
    %v377 = vunpack.c.l.b16 %v341
    %v378 = vunpack.c.l.b16 %v342
    %v379 = vunpack.c.l.b16 %v343
    %v380 = vunpack.c.l.b16 %v344
    %v381 = vunpack.c.l.b16 %v345
    %v382 = vunpack.c.l.b16 %v346
    %v383 = vunpack.c.l.b16 %v347
    %v384 = vpack.c.b16 %v369, %v368
    %v385 = vpack.c.b16 %v371, %v370
    %v386 = vpack.c.b16 %v373, %v372
    %v387 = vpack.c.b16 %v375, %v374
    %v388 = vpack.c.b16 %v377, %v376
    %v389 = vpack.c.b16 %v379, %v378
    %v390 = vpack.c.b16 %v381, %v380
    %v391 = vpack.c.b16 %v383, %v382
    %400 = vmatpush.bf16.msra.mxu0 %v391
    %401 = vmatpush.bf16.msra.mxu0 %v390
    %402 = vmatpush.bf16.msra.mxu0 %v389
    %403 = vmatpush.bf16.msra.mxu0 %v388
    %404 = vmatpush.bf16.msra.mxu0 %v387
    %405 = vmatpush.bf16.msra.mxu0 %v386
    %406 = vmatpush.bf16.msra.mxu0 %v385
    %407 = vmatpush.bf16.msra.mxu0 %v384
    %408 = vmatmul.bf16.gmra.mxu0 %v331
    %v409 = vpop.f32.mrf.mxu0
    %v410 = vadd.f32 %v350, %v409
    %v411 = vpop.f32.mrf.mxu0
    %v412 = vadd.f32 %v350, %v411
    %413 = vdwg.mxu0
    %414 = vmax.xlane.f32.xlu0 %v410
    %v415 = vpop.xlane.xlu0 %414
    %416 = vmax.xlane.f32.xlu0 %v412
    %v417 = vpop.xlane.xlu0 %416
    %v418 = vsub.f32 %v410, %v415
    %v419 = vsub.f32 %v412, %v417
    %v420 = vmul.f32 %v418, 1.442695
    %v421 = vpow.pop %v420
    %v422 = vmul.f32 %v419, 1.442695
    %v423 = vpow.pop %v422
    %424 = vadd.xlane.f32.xlu0 %v421
    %v425 = vpop.xlane.xlu0 %424
    %426 = vadd.xlane.f32.xlu0 %v423
    %v427 = vpop.xlane.xlu0 %426
    %v428 = vrcp.pop %v425
    %v429 = vrcp.pop %v427
    %v430 = vmul.f32 %v421, %v428
    %v431 = vmul.f32 %v423, %v429
    %v432 = vpack.c.bf16 %v431, %v430
    %v433 = vld [vmem:[%s7] sm:$0xf]
    %v434 = vld [vmem:[%s7 + $0x4] sm:$0xf]
    %v435 = vld [vmem:[%s7 + $0x8] sm:$0xf]
    %v436 = vld [vmem:[%s7 + $0xc] sm:$0xf]
    %v437 = vld [vmem:[%s7 + $0x10] sm:$0xf]
    %v438 = vld [vmem:[%s7 + $0x14] sm:$0xf]
    %v439 = vld [vmem:[%s7 + $0x18] sm:$0xf]
    %v440 = vld [vmem:[%s7 + $0x1c] sm:$0xf]
    %v441 = vld [vmem:[%s7 + $0x20] sm:$0xf]
    %v442 = vld [vmem:[%s7 + $0x24] sm:$0xf]
    %v443 = vld [vmem:[%s7 + $0x28] sm:$0xf]
    %v444 = vld [vmem:[%s7 + $0x2c] sm:$0xf]
    %v445 = vld [vmem:[%s7 + $0x30] sm:$0xf]
    %v446 = vld [vmem:[%s7 + $0x34] sm:$0xf]
    %v447 = vld [vmem:[%s7 + $0x38] sm:$0xf]
    %v448 = vld [vmem:[%s7 + $0x3c] sm:$0xf]
    %v449 = vld [vmem:[%s8] sm:$0x1]
    %v451 = vperm.slane %v449, 0
    %v469 = vunpack.c.l.b16 %v433
    %v470 = vunpack.c.l.b16 %v434
    %v471 = vunpack.c.l.b16 %v435
    %v472 = vunpack.c.l.b16 %v436
    %v473 = vunpack.c.l.b16 %v437
    %v474 = vunpack.c.l.b16 %v438
    %v475 = vunpack.c.l.b16 %v439
    %v476 = vunpack.c.l.b16 %v440
    %v477 = vunpack.c.l.b16 %v441
    %v478 = vunpack.c.l.b16 %v442
    %v479 = vunpack.c.l.b16 %v443
    %v480 = vunpack.c.l.b16 %v444
    %v481 = vunpack.c.l.b16 %v445
    %v482 = vunpack.c.l.b16 %v446
    %v483 = vunpack.c.l.b16 %v447
    %v484 = vunpack.c.l.b16 %v448
    %v485 = vpack.c.b16 %v470, %v469
    %v486 = vpack.c.b16 %v472, %v471
    %v487 = vpack.c.b16 %v474, %v473
    %v488 = vpack.c.b16 %v476, %v475
    %v489 = vpack.c.b16 %v478, %v477
    %v490 = vpack.c.b16 %v480, %v479
    %v491 = vpack.c.b16 %v482, %v481
    %v492 = vpack.c.b16 %v484, %v483
    %501 = vmatpush.bf16.msra.mxu0 %v492
    %502 = vmatpush.bf16.msra.mxu0 %v491
    %503 = vmatpush.bf16.msra.mxu0 %v490
    %504 = vmatpush.bf16.msra.mxu0 %v489
    %505 = vmatpush.bf16.msra.mxu0 %v488
    %506 = vmatpush.bf16.msra.mxu0 %v487
    %507 = vmatpush.bf16.msra.mxu0 %v486
    %508 = vmatpush.bf16.msra.mxu0 %v485
    %509 = vmatmul.bf16.gmra.mxu0 %v432
    %v510 = vpop.f32.mrf.mxu0
    %v511 = vadd.f32 %v451, %v510
    %v512 = vpop.f32.mrf.mxu0
    %v513 = vadd.f32 %v451, %v512
    %514 = vdwg.mxu0
    %vm515 = vcmask 64512
    %516 = vst.msk [vmem:[%s9] sm:$0xff] %vm515, %v511
    %517 = vst.msk [vmem:[%s9 + $0x8] sm:$0xff] %vm515, %v513
    // Predicated region
    $region50: #{mlp_forward.1} parent=1 // pred_check
      _
    $region51: #{mlp_forward.1} parent=1 // pred_check_branch
      %519 = sbr.rel (0) target = $region53
    $region52: #{mlp_forward.1} parent=1 // pred_region
      _
    $region53: #{mlp_forward.1} parent=1 // pred_fallthru
      _
    // Predicated region
    $region54: #{mlp_forward.1} parent=1 // pred_check
      _
    $region55: #{mlp_forward.1} parent=1 // pred_check_branch
      %521 = sbr.rel (0) target = $region57
    $region56: #{mlp_forward.1} parent=1 // pred_region
      _
    $region57: #{mlp_forward.1} parent=1 // pred_fallthru
      _
    %522 = vsyncpa [#allocation3], 1
    %523 = vsyncpa [#allocation5], 1

</llo_original>
